<compile_context>
chip_gen: v7x
topology: tpu7x:2x2x1
jax: 0.10.0
libtpu: 0.0.40
codegen_flags: <defaults>
</compile_context>

<pallas_src>
import functools

import jax
import jax.numpy as jnp
from jax import lax
from jax.experimental import pallas as pl
from jax.experimental.pallas import tpu as pltpu

EPS = 1e-5  # PyTorch InstanceNorm1d default eps


# --------------------------------------------------------------------------- #
# Kernel 1: Conv2d(C, C, (1, K), padding (0, K//2)) + bias + ReLU + residual,
#           computed in the flat (C, H*W) layout as ONE (C, K*C) x (K*C, H*W)
#           MXU matmul (no kron(W_k, I_H) waste).
# --------------------------------------------------------------------------- #
def _conv_kernel(x_ref, wconv_ref, bconv_ref, mask_ref, y_ref, im2col):
    # x_ref    : (1, C, HW) f32   one batch element, flat (C, H*W) view
    # wconv_ref: (C, K*C)   bf16  column block k holds conv tap k
    # bconv_ref: (C, 1)     f32   conv bias (per output channel)
    # mask_ref : (K, HW)    f32   per-tap halo mask (1 inside the W segment, 0 halo)
    # y_ref    : (1, C, HW) f32   relu(conv(x) + b) + x
    # im2col   : (K*C, HW)  bf16  VMEM scratch
    C = x_ref.shape[1]
    HW = x_ref.shape[2]
    K = wconv_ref.shape[1] // C
    pad = K // 2

    x = x_ref[0]                                   # (C, HW) f32, live for residual

    # Tap k needs x[c, h, w + k - pad] at flat position h*W + w. A lane roll by
    # (pad - k) gives that everywhere except the per-segment halo (and the wrap at
    # the ends of the HW axis) -- exactly the region the mask zeroes.
    for k in range(K):                             # K static -> fully unrolled
        shift = (pad - k) % HW
        r = pltpu.roll(x, shift=shift, axis=1) if shift else x
        if k != pad:                               # center tap has no halo
            r = r * mask_ref[k:k + 1, :]
        im2col[k * C:(k + 1) * C, :] = r.astype(jnp.bfloat16)

    acc = jnp.dot(wconv_ref[...], im2col[...],
                  preferred_element_type=jnp.float32)          # (C, HW) f32
    y_ref[0] = (jnp.maximum(acc + bconv_ref[...], 0.0) + x).astype(y_ref.dtype)


# --------------------------------------------------------------------------- #
# Kernel 2: InstanceNorm -> Linear -> ReLU -> Linear -> +residual -> InstanceNorm,
#           in the (C*H, W) layout.
# --------------------------------------------------------------------------- #
def _norm_fc_kernel(y_ref, w1_ref, w2_ref, cols_ref, out_ref):
    # y_ref   : (1, CH, W) f32  relu(conv)+x ((C*H, W) view of kernel-1's output)
    # w1_ref  : (CH, CH)   bf16
    # w2_ref  : (CH, CH)   bf16
    # cols_ref: (CH, 8)    f32  packed [gamma0, beta0, b1, b2, gamma1, beta1, 0, 0]
    # out_ref : (1, CH, W) f32
    y = y_ref[0].astype(jnp.float32)

    g0, be0 = cols_ref[:, 0:1], cols_ref[:, 1:2]
    b1, b2 = cols_ref[:, 2:3], cols_ref[:, 3:4]
    g1, be1 = cols_ref[:, 4:5], cols_ref[:, 5:6]

    def inorm(v, gamma, beta):
        # Centered two-pass variance (review correctness item): avoids the
        # E[v^2] - E[v]^2 cancellation of the previous one-pass version.
        m = jnp.mean(v, axis=-1, keepdims=True)
        d = v - m
        var = jnp.mean(d * d, axis=-1, keepdims=True)
        return d * (gamma * lax.rsqrt(var + EPS)) + beta

    y = inorm(y, g0, be0)
    z = jnp.dot(w1_ref[...], y.astype(jnp.bfloat16),
                preferred_element_type=jnp.float32) + b1
    z = jnp.maximum(z, 0.0)
    z = jnp.dot(w2_ref[...], z.astype(jnp.bfloat16),
                preferred_element_type=jnp.float32) + b2
    out_ref[0] = inorm(z + y, g1, be1).astype(out_ref.dtype)


def _vmem_limit(bytes_est):
    # Shape-derived scoped-VMEM request (review item 3): cover the working set,
    # floor at 16 MiB, cap at 56 MiB so it stays inside v7x's 64 MiB physical VMEM
    # (v5e/v6e have 128 MiB, so the cap only ever helps).
    return int(min(56 * 2 ** 20, max(16 * 2 ** 20, bytes_est)))


def tds_block(x, params, *, in_channels, num_features, kernel_size):
    """x: (B, CH, W) float32, CH = in_channels * num_features. Eval-mode forward."""
    B, CH, W = x.shape
    C, H = in_channels, num_features
    assert CH == C * H
    K = kernel_size
    HW = H * W
    pad = K // 2

    # ---- conv weight (C, C, 1, K) -> (C, K*C): column block k = tap k ----
    wconv = jnp.concatenate([params["wconv"][:, :, 0, k] for k in range(K)],
                            axis=1).astype(jnp.bfloat16)              # (C, K*C)
    bconv = params["bconv"].reshape(C, 1).astype(jnp.float32)

    # ---- per-tap multiplicative halo masks on the flattened H*W axis ----
    wpos = jnp.arange(HW, dtype=jnp.int32) % W
    tap_masks = []
    for k in range(K):
        dlo = max(0, pad - k)
        dhi = max(W - max(0, k - pad), 0)
        tap_masks.append((wpos >= dlo) & (wpos < dhi))
    mask = jnp.stack(tap_masks).astype(jnp.float32)                    # (K, HW)

    # ---- FC weights + packed per-channel params (one small DMA per step) ----
    w1 = params["w1"].astype(jnp.bfloat16)
    w2 = params["w2"].astype(jnp.bfloat16)
    colv = lambda v: v.reshape(CH, 1).astype(jnp.float32)
    cols = jnp.concatenate(
        [colv(params["gamma0"]), colv(params["beta0"]),
         colv(params["b1"]), colv(params["b2"]),
         colv(params["gamma1"]), colv(params["beta1"]),
         jnp.zeros((CH, 2), jnp.float32)], axis=1)                     # (CH, 8)

    const = lambda shape: pl.BlockSpec(shape, lambda b: (0,) * len(shape))

    # ---- kernel 1: conv + bias + ReLU + residual in the flat (C, H*W) layout ----
    x_flat = x.reshape(B, C, HW)            # free view: same bytes as (B, C*H, W)
    est1 = (2 * 2 * C * HW * 4              # double-buffered x / y blocks (f32)
            + K * C * HW * 2                # im2col scratch (bf16)
            + 4 * C * HW * 4                # live temporaries (x, rolls, acc)
            + (C * K * C + K * HW) * 2 * 2
            + (1 << 20))
    y1_flat = pl.pallas_call(
        _conv_kernel,
        out_shape=jax.ShapeDtypeStruct((B, C, HW), jnp.float32),
        grid=(B,),
        in_specs=[
            pl.BlockSpec((1, C, HW), lambda b: (b, 0, 0)),
            const((C, K * C)),
            const((C, 1)),
            const((K, HW)),
        ],
        out_specs=pl.BlockSpec((1, C, HW), lambda b: (b, 0, 0)),
        scratch_shapes=[pltpu.VMEM((K * C, HW), jnp.bfloat16)],
        compiler_params=pltpu.CompilerParams(
            dimension_semantics=("parallel",),
            vmem_limit_bytes=_vmem_limit(est1)),
    )(x_flat, wconv, bconv, mask)

    # ---- kernel 2: IN0 -> FC1 -> ReLU -> FC2 -> +res -> IN1 in (C*H, W) layout ----
    # Free XLA reshape: (B, C, H*W) and (B, C*H, W) share the same linear layout.
    y1 = y1_flat.reshape(B, CH, W)
    est2 = (2 * 2 * CH * W * 4              # double-buffered y / out blocks (f32)
            + 2 * 2 * CH * CH * 2           # double-buffered w1 / w2 (bf16)
            + 6 * CH * W * 4                # live temporaries (y, z, bf16 casts)
            + (1 << 20))
    out = pl.pallas_call(
        _norm_fc_kernel,
        out_shape=jax.ShapeDtypeStruct((B, CH, W), x.dtype),
        grid=(B,),
        in_specs=[
            pl.BlockSpec((1, CH, W), lambda b: (b, 0, 0)),
            const((CH, CH)),
            const((CH, CH)),
            const((CH, 8)),
        ],
        out_specs=pl.BlockSpec((1, CH, W), lambda b: (b, 0, 0)),
        compiler_params=pltpu.CompilerParams(
            dimension_semantics=("parallel",),
            vmem_limit_bytes=_vmem_limit(est2)),
    )(y1, w1, w2, cols)
    return out


def tds_block_ref(x, params, *, in_channels, num_features, kernel_size):
    """Pure-JAX f32 reference mirroring the PyTorch forward (eval mode)."""
    B, CH, W = x.shape
    C, H = in_channels, num_features
    K = kernel_size
    pad = K // 2
    x4 = x.reshape(B, C, H, W)
    xp = jnp.pad(x4, ((0, 0), (0, 0), (0, 0), (pad, pad)))
    y = jnp.zeros((B, C, H, W), jnp.float32)
    for k in range(K):
        y = y + jnp.einsum("oi,bihw->bohw",
                           params["wconv"][:, :, 0, k], xp[:, :, :, k:k + W])
    y = y + params["bconv"][None, :, None, None]
    y = jax.nn.relu(y).reshape(B, CH, W) + x

    def inorm(v, g, b):
        m = v.mean(-1, keepdims=True)
        var = ((v - m) ** 2).mean(-1, keepdims=True)
        return (v - m) / jnp.sqrt(var + EPS) * g[None, :, None] + b[None, :, None]

    y = inorm(y, params["gamma0"], params["beta0"])
    z = jnp.einsum("oi,biw->bow", params["w1"], y) + params["b1"][None, :, None]
    z = jax.nn.relu(z)
    z = jnp.einsum("oi,biw->bow", params["w2"], z) + params["b2"][None, :, None]
    y = z + y
    y = inorm(y, params["gamma1"], params["beta1"])
    return y


if __name__ == "__main__":
    # Small shapes: in_channels C=4, num_features H=8 -> CH=32; W=16; K=5; B=2.
    B, C, H, W, K = 2, 4, 8, 16, 5
    CH = C * H

    key = jax.random.PRNGKey(0)
    ks = jax.random.split(key, 11)
    params = {
        "wconv": 0.1 * jax.random.normal(ks[0], (C, C, 1, K), jnp.float32),
        "bconv": 0.1 * jax.random.normal(ks[1], (C,), jnp.float32),
        "gamma0": 1.0 + 0.1 * jax.random.normal(ks[2], (CH,), jnp.float32),
        "beta0": 0.1 * jax.random.normal(ks[3], (CH,), jnp.float32),
        "w1": jax.random.normal(ks[4], (CH, CH), jnp.float32) / jnp.sqrt(CH),
        "b1": 0.1 * jax.random.normal(ks[5], (CH,), jnp.float32),
        "w2": jax.random.normal(ks[6], (CH, CH), jnp.float32) / jnp.sqrt(CH),
        "b2": 0.1 * jax.random.normal(ks[7], (CH,), jnp.float32),
        "gamma1": 1.0 + 0.1 * jax.random.normal(ks[8], (CH,), jnp.float32),
        "beta1": 0.1 * jax.random.normal(ks[9], (CH,), jnp.float32),
    }
    x = jax.random.normal(ks[10], (B, CH, W), jnp.float32)

    fwd = jax.jit(functools.partial(tds_block, in_channels=C, num_features=H,
                                    kernel_size=K))
    out = jax.block_until_ready(fwd(x, params))

    ref = tds_block_ref(x, params, in_channels=C, num_features=H, kernel_size=K)
    assert out.shape == (B, CH, W)
    err = float(jnp.max(jnp.abs(out - ref)))
    # bf16 MXU operands (f32 accumulation) vs. the f32 reference -> relaxed tolerance.
    assert jnp.allclose(out, ref, atol=7.5e-2, rtol=7.5e-2), err
    print("KERNEL_OK")
</pallas_src>

<mosaic_0001>
module attributes {stable_mosaic.version = 11 : i64} {
  func.func @_conv_kernel(%arg0: i32, %arg1: memref<1x4x128xf32, #tpu.memory_space<vmem>>, %arg2: memref<4x20xbf16, #tpu.memory_space<vmem>>, %arg3: memref<4x1xf32, #tpu.memory_space<vmem>>, %arg4: memref<5x128xf32, #tpu.memory_space<vmem>>, %arg5: memref<1x4x128xf32, #tpu.memory_space<vmem>>, %arg6: memref<20x128xbf16, #tpu.memory_space<vmem>>) attributes {dimension_semantics = [#tpu.dimension_semantics<parallel>], iteration_bounds = array<i64: 2>, scalar_prefetch = 0 : i64, scratch_operands = 1 : i64, tpu.core_type = #tpu.core_type<tc>, window_params = [{transform_indices = @transform_0, window_bounds = array<i64: 1, 4, 128>}, {pipeline_mode = #tpu.pipeline_mode<synchronous>, transform_indices = @transform_1, window_bounds = array<i64: 4, 20>}, {pipeline_mode = #tpu.pipeline_mode<synchronous>, transform_indices = @transform_2, window_bounds = array<i64: 4, 1>}, {pipeline_mode = #tpu.pipeline_mode<synchronous>, transform_indices = @transform_3, window_bounds = array<i64: 5, 128>}, {transform_indices = @transform_4, window_bounds = array<i64: 1, 4, 128>}]} {
    %c0 = arith.constant 0 : index
    %c0_0 = arith.constant 0 : index
    %c0_1 = arith.constant 0 : index
    %0 = vector.load %arg1[%c0, %c0_0, %c0_1] : memref<1x4x128xf32, #tpu.memory_space<vmem>>, vector<1x4x128xf32>
    %1 = vector.shape_cast %0 : vector<1x4x128xf32> to vector<4x128xf32>
    %c2_i32 = arith.constant 2 : i32
    %2 = tpu.dynamic_rotate %1 by %c2_i32 dim 1 : vector<4x128xf32>, i32 -> vector<4x128xf32>
    %c0_2 = arith.constant 0 : index
    %c0_3 = arith.constant 0 : index
    %3 = vector.load %arg4[%c0_2, %c0_3] : memref<5x128xf32, #tpu.memory_space<vmem>>, vector<1x128xf32>
    %4 = vector.broadcast %3 : vector<1x128xf32> to vector<4x128xf32>
    %5 = arith.mulf %2, %4 : vector<4x128xf32>
    %6 = arith.truncf %5 : vector<4x128xf32> to vector<4x128xbf16>
    %c0_4 = arith.constant 0 : index
    %c0_5 = arith.constant 0 : index
    %7 = vector.load %arg6[%c0_4, %c0_5] : memref<20x128xbf16, #tpu.memory_space<vmem>>, vector<4x128xbf16>
    tpu.vector_store %arg6[%c0_4, %c0_5], %6 {strides = array<i32>} : memref<20x128xbf16, #tpu.memory_space<vmem>>, vector<4x128xbf16>,
    %c1_i32 = arith.constant 1 : i32
    %8 = tpu.dynamic_rotate %1 by %c1_i32 dim 1 : vector<4x128xf32>, i32 -> vector<4x128xf32>
    %c1 = arith.constant 1 : index
    %c0_6 = arith.constant 0 : index
    %9 = vector.load %arg4[%c1, %c0_6] : memref<5x128xf32, #tpu.memory_space<vmem>>, vector<1x128xf32>
    %10 = vector.broadcast %9 : vector<1x128xf32> to vector<4x128xf32>
    %11 = arith.mulf %8, %10 : vector<4x128xf32>
    %12 = arith.truncf %11 : vector<4x128xf32> to vector<4x128xbf16>
    %c4 = arith.constant 4 : index
    %c0_7 = arith.constant 0 : index
    %13 = vector.load %arg6[%c4, %c0_7] : memref<20x128xbf16, #tpu.memory_space<vmem>>, vector<4x128xbf16>
    tpu.vector_store %arg6[%c4, %c0_7], %12 {strides = array<i32>} : memref<20x128xbf16, #tpu.memory_space<vmem>>, vector<4x128xbf16>,
    %14 = arith.truncf %1 : vector<4x128xf32> to vector<4x128xbf16>
    %c8 = arith.constant 8 : index
    %c0_8 = arith.constant 0 : index
    %15 = vector.load %arg6[%c8, %c0_8] : memref<20x128xbf16, #tpu.memory_space<vmem>>, vector<4x128xbf16>
    tpu.vector_store %arg6[%c8, %c0_8], %14 {strides = array<i32>} : memref<20x128xbf16, #tpu.memory_space<vmem>>, vector<4x128xbf16>,
    %c127_i32 = arith.constant 127 : i32
    %16 = tpu.dynamic_rotate %1 by %c127_i32 dim 1 : vector<4x128xf32>, i32 -> vector<4x128xf32>
    %c3 = arith.constant 3 : index
    %c0_9 = arith.constant 0 : index
    %17 = vector.load %arg4[%c3, %c0_9] : memref<5x128xf32, #tpu.memory_space<vmem>>, vector<1x128xf32>
    %18 = vector.broadcast %17 : vector<1x128xf32> to vector<4x128xf32>
    %19 = arith.mulf %16, %18 : vector<4x128xf32>
    %20 = arith.truncf %19 : vector<4x128xf32> to vector<4x128xbf16>
    %c12 = arith.constant 12 : index
    %c0_10 = arith.constant 0 : index
    %21 = vector.load %arg6[%c12, %c0_10] : memref<20x128xbf16, #tpu.memory_space<vmem>>, vector<4x128xbf16>
    tpu.vector_store %arg6[%c12, %c0_10], %20 {strides = array<i32>} : memref<20x128xbf16, #tpu.memory_space<vmem>>, vector<4x128xbf16>,
    %c126_i32 = arith.constant 126 : i32
    %22 = tpu.dynamic_rotate %1 by %c126_i32 dim 1 : vector<4x128xf32>, i32 -> vector<4x128xf32>
    %c4_11 = arith.constant 4 : index
    %c0_12 = arith.constant 0 : index
    %23 = vector.load %arg4[%c4_11, %c0_12] : memref<5x128xf32, #tpu.memory_space<vmem>>, vector<1x128xf32>
    %24 = vector.broadcast %23 : vector<1x128xf32> to vector<4x128xf32>
    %25 = arith.mulf %22, %24 : vector<4x128xf32>
    %26 = arith.truncf %25 : vector<4x128xf32> to vector<4x128xbf16>
    %c16 = arith.constant 16 : index
    %c0_13 = arith.constant 0 : index
    %27 = vector.load %arg6[%c16, %c0_13] : memref<20x128xbf16, #tpu.memory_space<vmem>>, vector<4x128xbf16>
    tpu.vector_store %arg6[%c16, %c0_13], %26 {strides = array<i32>} : memref<20x128xbf16, #tpu.memory_space<vmem>>, vector<4x128xbf16>,
    %c0_14 = arith.constant 0 : index
    %c0_15 = arith.constant 0 : index
    %28 = vector.load %arg2[%c0_14, %c0_15] : memref<4x20xbf16, #tpu.memory_space<vmem>>, vector<4x20xbf16>
    %c0_16 = arith.constant 0 : index
    %c0_17 = arith.constant 0 : index
    %29 = vector.load %arg6[%c0_16, %c0_17] : memref<20x128xbf16, #tpu.memory_space<vmem>>, vector<20x128xbf16>
    %cst = arith.constant dense<0.000000e+00> : vector<4x128xf32>
    %30 = tpu.matmul %28, %29, %cst {dimension_numbers = #tpu.dot_dimension_numbers<[1], [0], [0], [1], [0, 0, 1, 1], [], []>} : vector<4x20xbf16>, vector<20x128xbf16>, vector<4x128xf32> -> vector<4x128xf32>
    %c0_18 = arith.constant 0 : index
    %c0_19 = arith.constant 0 : index
    %31 = vector.load %arg3[%c0_18, %c0_19] : memref<4x1xf32, #tpu.memory_space<vmem>>, vector<4x1xf32>
    %32 = vector.broadcast %31 : vector<4x1xf32> to vector<4x128xf32>
    %33 = arith.addf %30, %32 : vector<4x128xf32>
    %cst_20 = arith.constant 0.000000e+00 : f32
    %34 = vector.broadcast %cst_20 : f32 to vector<4x128xf32>
    %35 = arith.maximumf %33, %34 : vector<4x128xf32>
    %36 = arith.addf %35, %1 : vector<4x128xf32>
    %c0_21 = arith.constant 0 : index
    %c0_22 = arith.constant 0 : index
    %c0_23 = arith.constant 0 : index
    %37 = vector.load %arg5[%c0_21, %c0_22, %c0_23] : memref<1x4x128xf32, #tpu.memory_space<vmem>>, vector<1x4x128xf32>
    %38 = vector.shape_cast %37 : vector<1x4x128xf32> to vector<4x128xf32>
    %39 = vector.shape_cast %36 : vector<4x128xf32> to vector<1x4x128xf32>
    tpu.vector_store %arg5[%c0_21, %c0_22, %c0_23], %39 {strides = array<i32>} : memref<1x4x128xf32, #tpu.memory_space<vmem>>, vector<1x4x128xf32>,
    return
  }
  func.func @transform_0(%arg0: i32) -> (i32, i32, i32) {
    %c0_i32 = arith.constant 0 : i32
    %c0_i32_0 = arith.constant 0 : i32
    %c0_i32_1 = arith.constant 0 : i32
    return %arg0, %c0_i32, %c0_i32_0 : i32, i32, i32
  }
  func.func @transform_1(%arg0: i32) -> (i32, i32) {
    %c0_i32 = arith.constant 0 : i32
    %c0_i32_0 = arith.constant 0 : i32
    %c0_i32_1 = arith.constant 0 : i32
    return %c0_i32, %c0_i32_0 : i32, i32
  }
  func.func @transform_2(%arg0: i32) -> (i32, i32) {
    %c0_i32 = arith.constant 0 : i32
    %c0_i32_0 = arith.constant 0 : i32
    %c0_i32_1 = arith.constant 0 : i32
    return %c0_i32, %c0_i32_0 : i32, i32
  }
  func.func @transform_3(%arg0: i32) -> (i32, i32) {
    %c0_i32 = arith.constant 0 : i32
    %c0_i32_0 = arith.constant 0 : i32
    %c0_i32_1 = arith.constant 0 : i32
    return %c0_i32, %c0_i32_0 : i32, i32
  }
  func.func @transform_4(%arg0: i32) -> (i32, i32, i32) {
    %c0_i32 = arith.constant 0 : i32
    %c0_i32_0 = arith.constant 0 : i32
    %c0_i32_1 = arith.constant 0 : i32
    return %arg0, %c0_i32, %c0_i32_0 : i32, i32, i32
  }
}

module attributes {stable_mosaic.version = 11 : i64} {
  func.func @_norm_fc_kernel(%arg0: i32, %arg1: memref<1x32x16xf32, #tpu.memory_space<vmem>>, %arg2: memref<32x32xbf16, #tpu.memory_space<vmem>>, %arg3: memref<32x32xbf16, #tpu.memory_space<vmem>>, %arg4: memref<32x8xf32, #tpu.memory_space<vmem>>, %arg5: memref<1x32x16xf32, #tpu.memory_space<vmem>>) attributes {dimension_semantics = [#tpu.dimension_semantics<parallel>], iteration_bounds = array<i64: 2>, scalar_prefetch = 0 : i64, scratch_operands = 0 : i64, tpu.core_type = #tpu.core_type<tc>, window_params = [{transform_indices = @transform_0, window_bounds = array<i64: 1, 32, 16>}, {pipeline_mode = #tpu.pipeline_mode<synchronous>, transform_indices = @transform_1, window_bounds = array<i64: 32, 32>}, {pipeline_mode = #tpu.pipeline_mode<synchronous>, transform_indices = @transform_2, window_bounds = array<i64: 32, 32>}, {pipeline_mode = #tpu.pipeline_mode<synchronous>, transform_indices = @transform_3, window_bounds = array<i64: 32, 8>}, {transform_indices = @transform_4, window_bounds = array<i64: 1, 32, 16>}]} {
    %c0 = arith.constant 0 : index
    %c0_0 = arith.constant 0 : index
    %c0_1 = arith.constant 0 : index
    %0 = vector.load %arg1[%c0, %c0_0, %c0_1] : memref<1x32x16xf32, #tpu.memory_space<vmem>>, vector<1x32x16xf32>
    %1 = vector.shape_cast %0 : vector<1x32x16xf32> to vector<32x16xf32>
    %c0_2 = arith.constant 0 : index
    %c0_3 = arith.constant 0 : index
    %2 = vector.load %arg4[%c0_2, %c0_3] : memref<32x8xf32, #tpu.memory_space<vmem>>, vector<32x1xf32>
    %c0_4 = arith.constant 0 : index
    %c1 = arith.constant 1 : index
    %3 = vector.load %arg4[%c0_4, %c1] : memref<32x8xf32, #tpu.memory_space<vmem>>, vector<32x1xf32>
    %c0_5 = arith.constant 0 : index
    %c2 = arith.constant 2 : index
    %4 = vector.load %arg4[%c0_5, %c2] : memref<32x8xf32, #tpu.memory_space<vmem>>, vector<32x1xf32>
    %c0_6 = arith.constant 0 : index
    %c3 = arith.constant 3 : index
    %5 = vector.load %arg4[%c0_6, %c3] : memref<32x8xf32, #tpu.memory_space<vmem>>, vector<32x1xf32>
    %c0_7 = arith.constant 0 : index
    %c4 = arith.constant 4 : index
    %6 = vector.load %arg4[%c0_7, %c4] : memref<32x8xf32, #tpu.memory_space<vmem>>, vector<32x1xf32>
    %c0_8 = arith.constant 0 : index
    %c5 = arith.constant 5 : index
    %7 = vector.load %arg4[%c0_8, %c5] : memref<32x8xf32, #tpu.memory_space<vmem>>, vector<32x1xf32>
    %cst = arith.constant dense<0.000000e+00> : vector<32xf32>
    %8 = vector.multi_reduction <add>, %1, %cst [1] : vector<32x16xf32> to vector<32xf32>
    %9 = vector.shape_cast %8 : vector<32xf32> to vector<32x1xf32>
    %cst_9 = arith.constant 1.600000e+01 : f32
    %10 = vector.broadcast %cst_9 : f32 to vector<32x1xf32>
    %11 = arith.divf %9, %10 : vector<32x1xf32>
    %12 = vector.broadcast %11 : vector<32x1xf32> to vector<32x16xf32>
    %13 = arith.subf %1, %12 : vector<32x16xf32>
    %14 = arith.mulf %13, %13 : vector<32x16xf32>
    %cst_10 = arith.constant dense<0.000000e+00> : vector<32xf32>
    %15 = vector.multi_reduction <add>, %14, %cst_10 [1] : vector<32x16xf32> to vector<32xf32>
    %16 = vector.shape_cast %15 : vector<32xf32> to vector<32x1xf32>
    %cst_11 = arith.constant 1.600000e+01 : f32
    %17 = vector.broadcast %cst_11 : f32 to vector<32x1xf32>
    %18 = arith.divf %16, %17 : vector<32x1xf32>
    %cst_12 = arith.constant 9.99999974E-6 : f32
    %19 = vector.broadcast %cst_12 : f32 to vector<32x1xf32>
    %20 = arith.addf %18, %19 : vector<32x1xf32>
    %21 = math.rsqrt %20 : vector<32x1xf32>
    %22 = arith.mulf %2, %21 : vector<32x1xf32>
    %23 = vector.broadcast %22 : vector<32x1xf32> to vector<32x16xf32>
    %24 = arith.mulf %13, %23 : vector<32x16xf32>
    %25 = vector.broadcast %3 : vector<32x1xf32> to vector<32x16xf32>
    %26 = arith.addf %24, %25 : vector<32x16xf32>
    %c0_13 = arith.constant 0 : index
    %c0_14 = arith.constant 0 : index
    %27 = vector.load %arg2[%c0_13, %c0_14] : memref<32x32xbf16, #tpu.memory_space<vmem>>, vector<32x32xbf16>
    %28 = arith.truncf %26 : vector<32x16xf32> to vector<32x16xbf16>
    %cst_15 = arith.constant dense<0.000000e+00> : vector<32x16xf32>
    %29 = tpu.matmul %27, %28, %cst_15 {dimension_numbers = #tpu.dot_dimension_numbers<[1], [0], [0], [1], [0, 0, 1, 1], [], []>} : vector<32x32xbf16>, vector<32x16xbf16>, vector<32x16xf32> -> vector<32x16xf32>
    %30 = vector.broadcast %4 : vector<32x1xf32> to vector<32x16xf32>
    %31 = arith.addf %29, %30 : vector<32x16xf32>
    %cst_16 = arith.constant 0.000000e+00 : f32
    %32 = vector.broadcast %cst_16 : f32 to vector<32x16xf32>
    %33 = arith.maximumf %31, %32 : vector<32x16xf32>
    %c0_17 = arith.constant 0 : index
    %c0_18 = arith.constant 0 : index
    %34 = vector.load %arg3[%c0_17, %c0_18] : memref<32x32xbf16, #tpu.memory_space<vmem>>, vector<32x32xbf16>
    %35 = arith.truncf %33 : vector<32x16xf32> to vector<32x16xbf16>
    %cst_19 = arith.constant dense<0.000000e+00> : vector<32x16xf32>
    %36 = tpu.matmul %34, %35, %cst_19 {dimension_numbers = #tpu.dot_dimension_numbers<[1], [0], [0], [1], [0, 0, 1, 1], [], []>} : vector<32x32xbf16>, vector<32x16xbf16>, vector<32x16xf32> -> vector<32x16xf32>
    %37 = vector.broadcast %5 : vector<32x1xf32> to vector<32x16xf32>
    %38 = arith.addf %36, %37 : vector<32x16xf32>
    %39 = arith.addf %38, %26 : vector<32x16xf32>
    %cst_20 = arith.constant dense<0.000000e+00> : vector<32xf32>
    %40 = vector.multi_reduction <add>, %39, %cst_20 [1] : vector<32x16xf32> to vector<32xf32>
    %41 = vector.shape_cast %40 : vector<32xf32> to vector<32x1xf32>
    %cst_21 = arith.constant 1.600000e+01 : f32
    %42 = vector.broadcast %cst_21 : f32 to vector<32x1xf32>
    %43 = arith.divf %41, %42 : vector<32x1xf32>
    %44 = vector.broadcast %43 : vector<32x1xf32> to vector<32x16xf32>
    %45 = arith.subf %39, %44 : vector<32x16xf32>
    %46 = arith.mulf %45, %45 : vector<32x16xf32>
    %cst_22 = arith.constant dense<0.000000e+00> : vector<32xf32>
    %47 = vector.multi_reduction <add>, %46, %cst_22 [1] : vector<32x16xf32> to vector<32xf32>
    %48 = vector.shape_cast %47 : vector<32xf32> to vector<32x1xf32>
    %cst_23 = arith.constant 1.600000e+01 : f32
    %49 = vector.broadcast %cst_23 : f32 to vector<32x1xf32>
    %50 = arith.divf %48, %49 : vector<32x1xf32>
    %cst_24 = arith.constant 9.99999974E-6 : f32
    %51 = vector.broadcast %cst_24 : f32 to vector<32x1xf32>
    %52 = arith.addf %50, %51 : vector<32x1xf32>
    %53 = math.rsqrt %52 : vector<32x1xf32>
    %54 = arith.mulf %6, %53 : vector<32x1xf32>
    %55 = vector.broadcast %54 : vector<32x1xf32> to vector<32x16xf32>
    %56 = arith.mulf %45, %55 : vector<32x16xf32>
    %57 = vector.broadcast %7 : vector<32x1xf32> to vector<32x16xf32>
    %58 = arith.addf %56, %57 : vector<32x16xf32>
    %c0_25 = arith.constant 0 : index
    %c0_26 = arith.constant 0 : index
    %c0_27 = arith.constant 0 : index
    %59 = vector.load %arg5[%c0_25, %c0_26, %c0_27] : memref<1x32x16xf32, #tpu.memory_space<vmem>>, vector<1x32x16xf32>
    %60 = vector.shape_cast %59 : vector<1x32x16xf32> to vector<32x16xf32>
    %61 = vector.shape_cast %58 : vector<32x16xf32> to vector<1x32x16xf32>
    tpu.vector_store %arg5[%c0_25, %c0_26, %c0_27], %61 {strides = array<i32>} : memref<1x32x16xf32, #tpu.memory_space<vmem>>, vector<1x32x16xf32>,
    return
  }
  func.func @transform_0(%arg0: i32) -> (i32, i32, i32) {
    %c0_i32 = arith.constant 0 : i32
    %c0_i32_0 = arith.constant 0 : i32
    %c0_i32_1 = arith.constant 0 : i32
    return %arg0, %c0_i32, %c0_i32_0 : i32, i32, i32
  }
  func.func @transform_1(%arg0: i32) -> (i32, i32) {
    %c0_i32 = arith.constant 0 : i32
    %c0_i32_0 = arith.constant 0 : i32
    %c0_i32_1 = arith.constant 0 : i32
    return %c0_i32, %c0_i32_0 : i32, i32
  }
  func.func @transform_2(%arg0: i32) -> (i32, i32) {
    %c0_i32 = arith.constant 0 : i32
    %c0_i32_0 = arith.constant 0 : i32
    %c0_i32_1 = arith.constant 0 : i32
    return %c0_i32, %c0_i32_0 : i32, i32
  }
  func.func @transform_3(%arg0: i32) -> (i32, i32) {
    %c0_i32 = arith.constant 0 : i32
    %c0_i32_0 = arith.constant 0 : i32
    %c0_i32_1 = arith.constant 0 : i32
    return %c0_i32, %c0_i32_0 : i32, i32
  }
  func.func @transform_4(%arg0: i32) -> (i32, i32, i32) {
    %c0_i32 = arith.constant 0 : i32
    %c0_i32_0 = arith.constant 0 : i32
    %c0_i32_1 = arith.constant 0 : i32
    return %arg0, %c0_i32, %c0_i32_0 : i32, i32, i32
  }
}

</mosaic_0001>

<llo_original>
// kernel: tds_block.2
$region0: #{tds_block.2}
  #allocation0 [shape = 'u32[]', space=smem, size = 0x4, offset = 0x4, fixed_abs, tag = 'smem constant byte address 0x4 - core index']
  #allocation1 [shape = 'u32[144,128]{1,0:T(1,128)}', space=vmem, size = 0x12000, scoped, tag = 'internal scratch']
  #allocation2 [shape = 'bf16[20,128]{1,0:T(8,128)(2,1)}', space=vmem, size = 0x1800, scoped, tag = 'scratch operand']
  %s0 = inlined_call_operand.vmem [shape: f32[2,4,128], index: 0, kind: input, shape index: {}]
  %s1 = inlined_call_operand.vmem [shape: bf16[4,20], index: 1, kind: input, shape index: {}]
  %s2 = inlined_call_operand.vmem [shape: f32[4,1], index: 2, kind: input, shape index: {}]
  %s3 = inlined_call_operand.vmem [shape: f32[5,128], index: 3, kind: input, shape index: {}]
  %s4 = inlined_call_operand.vmem [shape: f32[2,4,128], index: 4, kind: output, shape index: {}]
  %s5 = sld [smem:[#allocation0]]
  $region49: #{tds_block.2} parent=0
    _
  %s7 = ssub.s32 1, %s5
  %s8 = scalar_select 0, %s7, %s5
  loop: start=0, step=1, limit=4
  $region2: #{tds_block.2} parent=0 // loop_pre_header
    _
  $region3: #{tds_block.2} parent=0 // loop_header
    %s10 = sphi 0, %s14
    %p11 = scmp.ge.s32.totalorder %s10, 4
    %s20 = sphi 0, %s22
    %s23 = sphi 0, %s20
    %s24 = sphi 0, %s23
    %s40 = sphi 0, %s24
    %s44 = sphi 0, %s44
    %s46 = sphi 0, %s44
    %s47 = sphi 0, %s46
    %s61 = sphi 0, %s47
    %s65 = sphi 0, %s65
    %s67 = sphi 0, %s65
    %s68 = sphi 0, %s67
    %s82 = sphi 0, %s68
    %s86 = sphi 0, %s86
    %s88 = sphi 0, %s86
    %s89 = sphi 0, %s88
    %s103 = sphi 0, %s89
    %s109 = sphi 0, %s111
    %s112 = sphi 0, %s109
    %s113 = sphi 0, %s112
    %s129 = sphi 0, %s113
  $region4: #{tds_block.2} parent=0 // loop_header_branch
    %13 = sbr.rel (%p11) target = $region8
  $region5: #{tds_block.2} parent=0 // loop_body
    %s15 = ssub.s32 %s10, 1
    %s16 = ssub.s32 %s10, 2
    %s17 = sadd.s32 %s10, 1
    %s18 = ssub.s32 %s10, %s17
    %p19 = scmp.eq.s32.totalorder %s18, 0
    %s21 = sadd.s32 %s20, 1
    %s22 = scalar_select %p19, %s20, %s21
    %p25 = pneg %p19
    %p26 = scmp.eq.s32.totalorder %s10, 1
    %p27 = por %p25, %p26
    %p28 = scmp.ne.s32.totalorder %s20, %s23
    %p29 = scmp.eq.s32.totalorder %s10, 0
    %p30 = por %p28, %p29
    %p31 = scmp.ne.s32.totalorder %s20, %s23
    %p32 = scmp.eq.s32.totalorder %s15, 1
    %p33 = por %p31, %p32
    %p34 = scmp.ne.s32.totalorder %s23, %s24
    %p35 = scmp.eq.s32.totalorder %s15, 0
    %p36 = por %p34, %p35
    %p37 = scmp.ne.s32.totalorder %s23, %s24
    %p38 = scmp.eq.s32.totalorder %s16, 1
    %p39 = por %p37, %p38
    %p41 = scmp.ne.s32.totalorder %s24, %s40
    %p42 = scmp.eq.s32.totalorder %s16, 0
    %p43 = por %p41, %p42
    %s45 = sadd.s32 %s44, 1
    %p48 = scmp.eq.s32.totalorder %s10, 1
    %p49 = scmp.ne.s32.totalorder %s44, %s46
    %p50 = scmp.eq.s32.totalorder %s10, 0
    %p51 = por %p49, %p50
    %p52 = scmp.ne.s32.totalorder %s44, %s46
    %p53 = scmp.eq.s32.totalorder %s15, 1
    %p54 = por %p52, %p53
    %p55 = scmp.ne.s32.totalorder %s46, %s47
    %p56 = scmp.eq.s32.totalorder %s15, 0
    %p57 = por %p55, %p56
    %p58 = scmp.ne.s32.totalorder %s46, %s47
    %p59 = scmp.eq.s32.totalorder %s16, 1
    %p60 = por %p58, %p59
    %p62 = scmp.ne.s32.totalorder %s47, %s61
    %p63 = scmp.eq.s32.totalorder %s16, 0
    %p64 = por %p62, %p63
    %s66 = sadd.s32 %s65, 1
    %p69 = scmp.eq.s32.totalorder %s10, 1
    %p70 = scmp.ne.s32.totalorder %s65, %s67
    %p71 = scmp.eq.s32.totalorder %s10, 0
    %p72 = por %p70, %p71
    %p73 = scmp.ne.s32.totalorder %s65, %s67
    %p74 = scmp.eq.s32.totalorder %s15, 1
    %p75 = por %p73, %p74
    %p76 = scmp.ne.s32.totalorder %s67, %s68
    %p77 = scmp.eq.s32.totalorder %s15, 0
    %p78 = por %p76, %p77
    %p79 = scmp.ne.s32.totalorder %s67, %s68
    %p80 = scmp.eq.s32.totalorder %s16, 1
    %p81 = por %p79, %p80
    %p83 = scmp.ne.s32.totalorder %s68, %s82
    %p84 = scmp.eq.s32.totalorder %s16, 0
    %p85 = por %p83, %p84
    %s87 = sadd.s32 %s86, 1
    %p90 = scmp.eq.s32.totalorder %s10, 1
    %p91 = scmp.ne.s32.totalorder %s86, %s88
    %p92 = scmp.eq.s32.totalorder %s10, 0
    %p93 = por %p91, %p92
    %p94 = scmp.ne.s32.totalorder %s86, %s88
    %p95 = scmp.eq.s32.totalorder %s15, 1
    %p96 = por %p94, %p95
    %p97 = scmp.ne.s32.totalorder %s88, %s89
    %p98 = scmp.eq.s32.totalorder %s15, 0
    %p99 = por %p97, %p98
    %p100 = scmp.ne.s32.totalorder %s88, %s89
    %p101 = scmp.eq.s32.totalorder %s16, 1
    %p102 = por %p100, %p101
    %p104 = scmp.ne.s32.totalorder %s89, %s103
    %p105 = scmp.eq.s32.totalorder %s16, 0
    %p106 = por %p104, %p105
    %s107 = ssub.s32 %s10, %s17
    %p108 = scmp.eq.s32.totalorder %s107, 0
    %s110 = sadd.s32 %s109, 1
    %s111 = scalar_select %p108, %s109, %s110
    %p114 = pneg %p108
    %p115 = scmp.eq.s32.totalorder %s10, 1
    %p116 = por %p114, %p115
    %p117 = scmp.ne.s32.totalorder %s109, %s112
    %p118 = scmp.eq.s32.totalorder %s10, 0
    %p119 = por %p117, %p118
    %p120 = scmp.ne.s32.totalorder %s109, %s112
    %p121 = scmp.eq.s32.totalorder %s15, 1
    %p122 = por %p120, %p121
    %p123 = scmp.ne.s32.totalorder %s112, %s113
    %p124 = scmp.eq.s32.totalorder %s15, 0
    %p125 = por %p123, %p124
    %p126 = scmp.ne.s32.totalorder %s112, %s113
    %p127 = scmp.eq.s32.totalorder %s16, 1
    %p128 = por %p126, %p127
    %p130 = scmp.ne.s32.totalorder %s113, %s129
    %p131 = scmp.eq.s32.totalorder %s16, 0
    %p132 = por %p130, %p131
    %p133 = scmp.le.s32.totalorder 1, %s10
    %p134 = scmp.lt.s32.totalorder %s10, 3
    %p135 = pnand %p133, %p134
    %p136 = pneg %p135
    // Predicated region
    $region9: #{tds_block.2} parent=5 // pred_check
      _
    $region10: #{tds_block.2} parent=5 // pred_check_branch
      %138 = sbr.rel (%p135) target = $region12
    $region11: #{tds_block.2} parent=5 // pred_region
      %s139 = ssub.s32 %s10, 1
      // Predicated region
      $region13: #{tds_block.2} parent=11 // pred_check
        %p140 = pneg %p57
      $region14: #{tds_block.2} parent=11 // pred_check_branch
        %142 = sbr.rel (%p140) target = $region16
      $region15: #{tds_block.2} parent=11 // pred_region
        _
      $region16: #{tds_block.2} parent=11 // pred_fallthru
        _
      // Predicated region
      $region17: #{tds_block.2} parent=11 // pred_check
        %p143 = pneg %p78
      $region18: #{tds_block.2} parent=11 // pred_check_branch
        %145 = sbr.rel (%p143) target = $region20
      $region19: #{tds_block.2} parent=11 // pred_region
        _
      $region20: #{tds_block.2} parent=11 // pred_fallthru
        _
      // Predicated region
      $region21: #{tds_block.2} parent=11 // pred_check
        %p146 = pneg %p99
      $region22: #{tds_block.2} parent=11 // pred_check_branch
        %148 = sbr.rel (%p146) target = $region24
      $region23: #{tds_block.2} parent=11 // pred_region
        _
      $region24: #{tds_block.2} parent=11 // pred_fallthru
        _
    $region12: #{tds_block.2} parent=5 // pred_fallthru
      _
    %p149 = scmp.lt.s32.totalorder %s10, 2
    // Predicated region
    $region25: #{tds_block.2} parent=5 // pred_check
      %p150 = pneg %p149
    $region26: #{tds_block.2} parent=5 // pred_check_branch
      %152 = sbr.rel (%p150) target = $region28
    $region27: #{tds_block.2} parent=5 // pred_region
      // Predicated region
      $region29: #{tds_block.2} parent=27 // pred_check
        %p153 = pneg %p30
      $region30: #{tds_block.2} parent=27 // pred_check_branch
        %155 = sbr.rel (%p153) target = $region32
      $region31: #{tds_block.2} parent=27 // pred_region
        %p156 = scmp.lt.s32.totalorder %s10, 1
        %s157 = scalar_select %p156, %s10, 1
        %s158 = smul.addr %s157, 4
        %s159 = scalar_lea.vmem %s0, %s158
      $region32: #{tds_block.2} parent=27 // pred_fallthru
        _
    $region28: #{tds_block.2} parent=5 // pred_fallthru
      _
    %p160 = scmp.le.s32.totalorder 1, %s10
    %p161 = scmp.lt.s32.totalorder %s10, 3
    %p162 = pnand %p160, %p161
    %p163 = pneg %p162
    // Predicated region
    $region33: #{tds_block.2} parent=5 // pred_check
      _
    $region34: #{tds_block.2} parent=5 // pred_check_branch
      %165 = sbr.rel (%p162) target = $region36
    $region35: #{tds_block.2} parent=5 // pred_region
      %s166 = ssub.s32 %s10, 1
      %p167 = scmp.lt.s32.totalorder %s15, 1
      %s168 = scalar_select %p167, %s15, 1
      %s169 = smul.addr %s168, 4
      %s170 = scalar_lea.vmem %s0, %s169
      %p171 = pneg %p36
      %p172 = pneg %p33
      %p173 = pneg %p57
      %p174 = pneg %p54
      %p175 = pneg %p78
      %p176 = pneg %p75
      %p177 = pneg %p99
      %p178 = pneg %p96
      %p179 = pneg %p125
      %p180 = pneg %p122
      %p181 = scmp.lt.s32.totalorder %s15, 1
      %s182 = scalar_select %p181, %s15, 1
      %s183 = smul.addr %s182, 4
      %s184 = scalar_lea.vmem %s4, %s183
      %p185 = scmp.lt.s32.totalorder %s15, 1
      %s186 = scalar_select %p185, %s15, 1
      %s187 = smul.addr %s186, 4
      %s188 = scalar_lea.vmem %s0, %s187
      %p189 = scmp.lt.s32.totalorder %s15, 1
      %s190 = scalar_select %p189, %s15, 1
      %s191 = smul.addr %s190, 4
      %s192 = scalar_lea.vmem %s4, %s191
      %v194 = vld [vmem:[%s188] sm:$0xf]
      %195 = vrot.lane.b32.xlu0 %v194, 2
      %v196 = vpop.permute.xlu0 %195
      %v197 = vld [vmem:[%s3] sm:$0x1]
      %v198 = vlaneseq
      %v199 = vshrl.u32 %v198, 7
      %v200 = vsub.s32 0, %v199
      %v201 = vrot.slane %v197, %v200
      %v202 = vmul.f32 %v196, %v201
      %v203 = vpack.c.bf16 %v202, %v202
      %204 = vst [vmem:[#allocation2] sm:$0x3] %v203
      %205 = vrot.lane.b32.xlu0 %v194, 1
      %v206 = vpop.permute.xlu0 %205
      %v207 = vld [vmem:[%s3 + $0x1] sm:$0x1]
      %v208 = vlaneseq
      %v209 = vshrl.u32 %v208, 7
      %v210 = vsub.s32 0, %v209
      %v211 = vrot.slane %v207, %v210
      %v212 = vmul.f32 %v206, %v211
      %v213 = vpack.c.bf16 %v212, %v212
      %v215 = vunpack.c.l.b16 %v213
      %v216 = vpack.c.b16 %v215, %v215
      %v217 = vrot.slane %v216, 6
      %219 = vst [vmem:[#allocation2] sm:$0xc] %v217
      %v220 = vpack.c.bf16 %v194, %v194
      %221 = vst [vmem:[#allocation2 + $0x4] sm:$0x3] %v220
      %222 = vrot.lane.b32.xlu0 %v194, 127
      %v223 = vpop.permute.xlu0 %222
      %v224 = vld [vmem:[%s3 + $0x3] sm:$0x1]
      %v225 = vlaneseq
      %v226 = vshrl.u32 %v225, 7
      %v227 = vsub.s32 0, %v226
      %v228 = vrot.slane %v224, %v227
      %v229 = vmul.f32 %v223, %v228
      %v230 = vpack.c.bf16 %v229, %v229
      %v232 = vunpack.c.l.b16 %v230
      %v233 = vpack.c.b16 %v232, %v232
      %v234 = vrot.slane %v233, 6
      %236 = vst [vmem:[#allocation2 + $0x4] sm:$0xc] %v234
      %237 = vrot.lane.b32.xlu0 %v194, 126
      %v238 = vpop.permute.xlu0 %237
      %v239 = vld [vmem:[%s3 + $0x4] sm:$0x1]
      %v240 = vlaneseq
      %v241 = vshrl.u32 %v240, 7
      %v242 = vsub.s32 0, %v241
      %v243 = vrot.slane %v239, %v242
      %v244 = vmul.f32 %v238, %v243
      %v245 = vpack.c.bf16 %v244, %v244
      %246 = vst [vmem:[#allocation2 + $0x8] sm:$0x3] %v245
      %v247 = vld [vmem:[%s1] sm:$0x3]
      %v248 = vld [vmem:[#allocation2] sm:$0xf]
      %v249 = vld [vmem:[#allocation2 + $0x4] sm:$0xf]
      %v250 = vld [vmem:[#allocation2 + $0x8] sm:$0x3]
      %v251 = vld [vmem:[%s2] sm:$0xf]
      %253 = vset.pattern.permute.xlu0 0
      %254 = vperm.xlu0 %253, %v251
      %v255 = vpop.permute.xlu0 %254
      %v260 = vunpack.c.l.b16 %v248
      %v261 = vunpack.c.l.b16 %v249
      %v262 = vunpack.c.l.b16 %v250
      %v263 = vpack.c.b16 %v261, %v260
      %v264 = vpack.c.b16 %v262, %v262
      %vm266 = vcmask 162816
      %v268 = vsel %vm266, %v247, 0
      %vm270 = vcmask 1041408
      %v272 = vsel %vm270, %v264, 0
      %274 = vmatprep.subr.bf16.mxu0 0
      %275 = vmatpush1.bf16.msra.mxu0 %v263
      %276 = vmatprep.subr.bf16.mxu0 0
      %277 = vmatpush1.bf16.msra.mxu0 %v272
      %278 = vmatprep.subr.bf16.mxu0 0
      %279 = vmatpush1.bf16.msra.mxu0 0
      %280 = vmatprep.subr.bf16.mxu0 0
      %281 = vmatpush1.bf16.msra.mxu0 0
      %282 = vmatprep.subr.bf16.mxu0 0
      %283 = vmatpush1.bf16.msra.mxu0 0
      %284 = vmatprep.subr.bf16.mxu0 0
      %285 = vmatpush1.bf16.msra.mxu0 0
      %286 = vmatprep.subr.bf16.mxu0 0
      %287 = vmatpush1.bf16.msra.mxu0 0
      %288 = vmatprep.subr.bf16.mxu0 0
      %289 = vmatpush1.bf16.msra.mxu0 0
      %290 = vmatprep.subr.bf16.mxu0 0
      %291 = vmatpush1.bf16.msra.mxu0 0
      %292 = vmatprep.subr.bf16.mxu0 0
      %293 = vmatpush1.bf16.msra.mxu0 0
      %294 = vmatprep.subr.bf16.mxu0 0
      %295 = vmatpush1.bf16.msra.mxu0 0
      %296 = vmatprep.subr.bf16.mxu0 0
      %297 = vmatpush1.bf16.msra.mxu0 0
      %298 = vmatprep.subr.bf16.mxu0 0
      %299 = vmatpush1.bf16.msra.mxu0 0
      %300 = vmatprep.subr.bf16.mxu0 0
      %301 = vmatpush1.bf16.msra.mxu0 0
      %302 = vmatprep.subr.bf16.mxu0 0
      %303 = vmatpush1.bf16.msra.mxu0 0
      %304 = vmatprep.subr.bf16.mxu0 0
      %305 = vmatpush1.bf16.msra.mxu0 0
      %306 = vmatprep.mubr.bf16.mxu0 0
      %307 = vmatmul.mubr.bf16.gmra.mrb[0].mxu0 %v268
      %v308 = vpop.f32.mrb[0].mxu0
      %v309 = vadd.f32 %v255, %v308
      %v310 = vpop.f32.mrb[0].mxu0
      %v311 = vpop.f32.mrb[0].mxu0
      %v312 = vpop.f32.mrb[0].mxu0
      %313 = vdwg.mxu0
      %v314 = vmax.f32 %v309, 0.0
      %v315 = vadd.f32 %v314, %v194
      %316 = vst [vmem:[%s192] sm:$0xf] %v315
      %p317 = scmp.lt.s32.totalorder %s15, 1
      %s318 = scalar_select %p317, %s15, 1
      %s319 = smul.addr %s318, 4
      %s320 = scalar_lea.vmem %s4, %s319
      // Predicated region
      $region37: #{tds_block.2} parent=35 // pred_check
        %p321 = pneg %p122
      $region38: #{tds_block.2} parent=35 // pred_check_branch
        %323 = sbr.rel (%p321) target = $region40
      $region39: #{tds_block.2} parent=35 // pred_region
        _
      $region40: #{tds_block.2} parent=35 // pred_fallthru
        _
    $region36: #{tds_block.2} parent=5 // pred_fallthru
      _
    %p324 = scmp.le.s32.totalorder 2, %s10
    // Predicated region
    $region41: #{tds_block.2} parent=5 // pred_check
      %p325 = pneg %p324
    $region42: #{tds_block.2} parent=5 // pred_check_branch
      %327 = sbr.rel (%p325) target = $region44
    $region43: #{tds_block.2} parent=5 // pred_region
      %s328 = ssub.s32 %s10, 2
      // Predicated region
      $region45: #{tds_block.2} parent=43 // pred_check
        %p329 = pneg %p128
      $region46: #{tds_block.2} parent=43 // pred_check_branch
        %331 = sbr.rel (%p329) target = $region48
      $region47: #{tds_block.2} parent=43 // pred_region
        %p332 = scmp.lt.s32.totalorder %s16, 1
        %s333 = scalar_select %p332, %s16, 1
        %s334 = smul.addr %s333, 4
        %s335 = scalar_lea.vmem %s4, %s334
      $region48: #{tds_block.2} parent=43 // pred_fallthru
        _
    $region44: #{tds_block.2} parent=5 // pred_fallthru
      _
  $region6: #{tds_block.2} parent=0 // loop_footer
    %s14 = sadd.s32 1, %s10
  $region7: #{tds_block.2} parent=0 // loop_footer_branch
    %9 = sbr.rel target = $region3
  $region8: #{tds_block.2} parent=0 // loop_exit
    _

// kernel: tds_block.3
$region0: #{tds_block.3}
  #allocation0 [shape = 'u32[]', space=smem, size = 0x4, offset = 0x4, fixed_abs, tag = 'smem constant byte address 0x4 - core index']
  #allocation1 [shape = 'u32[144,128]{1,0:T(1,128)}', space=vmem, size = 0x12000, scoped, tag = 'internal scratch']
  %s0 = inlined_call_operand.vmem [shape: f32[2,32,16], index: 0, kind: input, shape index: {}]
  %s1 = inlined_call_operand.vmem [shape: bf16[32,32], index: 1, kind: input, shape index: {}]
  %s2 = inlined_call_operand.vmem [shape: bf16[32,32], index: 2, kind: input, shape index: {}]
  %s3 = inlined_call_operand.vmem [shape: f32[32,8], index: 3, kind: input, shape index: {}]
  %s4 = inlined_call_operand.vmem [shape: f32[2,32,16], index: 4, kind: output, shape index: {}]
  %s5 = sld [smem:[#allocation0]]
  $region49: #{tds_block.3} parent=0
    _
  %s7 = ssub.s32 1, %s5
  %s8 = scalar_select 0, %s7, %s5
  loop: start=0, step=1, limit=4
  $region2: #{tds_block.3} parent=0 // loop_pre_header
    _
  $region3: #{tds_block.3} parent=0 // loop_header
    %s10 = sphi 0, %s14
    %p11 = scmp.ge.s32.totalorder %s10, 4
    %s20 = sphi 0, %s22
    %s23 = sphi 0, %s20
    %s24 = sphi 0, %s23
    %s40 = sphi 0, %s24
    %s44 = sphi 0, %s44
    %s46 = sphi 0, %s44
    %s47 = sphi 0, %s46
    %s61 = sphi 0, %s47
    %s65 = sphi 0, %s65
    %s67 = sphi 0, %s65
    %s68 = sphi 0, %s67
    %s82 = sphi 0, %s68
    %s86 = sphi 0, %s86
    %s88 = sphi 0, %s86
    %s89 = sphi 0, %s88
    %s103 = sphi 0, %s89
    %s109 = sphi 0, %s111
    %s112 = sphi 0, %s109
    %s113 = sphi 0, %s112
    %s129 = sphi 0, %s113
  $region4: #{tds_block.3} parent=0 // loop_header_branch
    %13 = sbr.rel (%p11) target = $region8
  $region5: #{tds_block.3} parent=0 // loop_body
    %s15 = ssub.s32 %s10, 1
    %s16 = ssub.s32 %s10, 2
    %s17 = sadd.s32 %s10, 1
    %s18 = ssub.s32 %s10, %s17
    %p19 = scmp.eq.s32.totalorder %s18, 0
    %s21 = sadd.s32 %s20, 1
    %s22 = scalar_select %p19, %s20, %s21
    %p25 = pneg %p19
    %p26 = scmp.eq.s32.totalorder %s10, 1
    %p27 = por %p25, %p26
    %p28 = scmp.ne.s32.totalorder %s20, %s23
    %p29 = scmp.eq.s32.totalorder %s10, 0
    %p30 = por %p28, %p29
    %p31 = scmp.ne.s32.totalorder %s20, %s23
    %p32 = scmp.eq.s32.totalorder %s15, 1
    %p33 = por %p31, %p32
    %p34 = scmp.ne.s32.totalorder %s23, %s24
    %p35 = scmp.eq.s32.totalorder %s15, 0
    %p36 = por %p34, %p35
    %p37 = scmp.ne.s32.totalorder %s23, %s24
    %p38 = scmp.eq.s32.totalorder %s16, 1
    %p39 = por %p37, %p38
    %p41 = scmp.ne.s32.totalorder %s24, %s40
    %p42 = scmp.eq.s32.totalorder %s16, 0
    %p43 = por %p41, %p42
    %s45 = sadd.s32 %s44, 1
    %p48 = scmp.eq.s32.totalorder %s10, 1
    %p49 = scmp.ne.s32.totalorder %s44, %s46
    %p50 = scmp.eq.s32.totalorder %s10, 0
    %p51 = por %p49, %p50
    %p52 = scmp.ne.s32.totalorder %s44, %s46
    %p53 = scmp.eq.s32.totalorder %s15, 1
    %p54 = por %p52, %p53
    %p55 = scmp.ne.s32.totalorder %s46, %s47
    %p56 = scmp.eq.s32.totalorder %s15, 0
    %p57 = por %p55, %p56
    %p58 = scmp.ne.s32.totalorder %s46, %s47
    %p59 = scmp.eq.s32.totalorder %s16, 1
    %p60 = por %p58, %p59
    %p62 = scmp.ne.s32.totalorder %s47, %s61
    %p63 = scmp.eq.s32.totalorder %s16, 0
    %p64 = por %p62, %p63
    %s66 = sadd.s32 %s65, 1
    %p69 = scmp.eq.s32.totalorder %s10, 1
    %p70 = scmp.ne.s32.totalorder %s65, %s67
    %p71 = scmp.eq.s32.totalorder %s10, 0
    %p72 = por %p70, %p71
    %p73 = scmp.ne.s32.totalorder %s65, %s67
    %p74 = scmp.eq.s32.totalorder %s15, 1
    %p75 = por %p73, %p74
    %p76 = scmp.ne.s32.totalorder %s67, %s68
    %p77 = scmp.eq.s32.totalorder %s15, 0
    %p78 = por %p76, %p77
    %p79 = scmp.ne.s32.totalorder %s67, %s68
    %p80 = scmp.eq.s32.totalorder %s16, 1
    %p81 = por %p79, %p80
    %p83 = scmp.ne.s32.totalorder %s68, %s82
    %p84 = scmp.eq.s32.totalorder %s16, 0
    %p85 = por %p83, %p84
    %s87 = sadd.s32 %s86, 1
    %p90 = scmp.eq.s32.totalorder %s10, 1
    %p91 = scmp.ne.s32.totalorder %s86, %s88
    %p92 = scmp.eq.s32.totalorder %s10, 0
    %p93 = por %p91, %p92
    %p94 = scmp.ne.s32.totalorder %s86, %s88
    %p95 = scmp.eq.s32.totalorder %s15, 1
    %p96 = por %p94, %p95
    %p97 = scmp.ne.s32.totalorder %s88, %s89
    %p98 = scmp.eq.s32.totalorder %s15, 0
    %p99 = por %p97, %p98
    %p100 = scmp.ne.s32.totalorder %s88, %s89
    %p101 = scmp.eq.s32.totalorder %s16, 1
    %p102 = por %p100, %p101
    %p104 = scmp.ne.s32.totalorder %s89, %s103
    %p105 = scmp.eq.s32.totalorder %s16, 0
    %p106 = por %p104, %p105
    %s107 = ssub.s32 %s10, %s17
    %p108 = scmp.eq.s32.totalorder %s107, 0
    %s110 = sadd.s32 %s109, 1
    %s111 = scalar_select %p108, %s109, %s110
    %p114 = pneg %p108
    %p115 = scmp.eq.s32.totalorder %s10, 1
    %p116 = por %p114, %p115
    %p117 = scmp.ne.s32.totalorder %s109, %s112
    %p118 = scmp.eq.s32.totalorder %s10, 0
    %p119 = por %p117, %p118
    %p120 = scmp.ne.s32.totalorder %s109, %s112
    %p121 = scmp.eq.s32.totalorder %s15, 1
    %p122 = por %p120, %p121
    %p123 = scmp.ne.s32.totalorder %s112, %s113
    %p124 = scmp.eq.s32.totalorder %s15, 0
    %p125 = por %p123, %p124
    %p126 = scmp.ne.s32.totalorder %s112, %s113
    %p127 = scmp.eq.s32.totalorder %s16, 1
    %p128 = por %p126, %p127
    %p130 = scmp.ne.s32.totalorder %s113, %s129
    %p131 = scmp.eq.s32.totalorder %s16, 0
    %p132 = por %p130, %p131
    %p133 = scmp.le.s32.totalorder 1, %s10
    %p134 = scmp.lt.s32.totalorder %s10, 3
    %p135 = pnand %p133, %p134
    %p136 = pneg %p135
    // Predicated region
    $region9: #{tds_block.3} parent=5 // pred_check
      _
    $region10: #{tds_block.3} parent=5 // pred_check_branch
      %138 = sbr.rel (%p135) target = $region12
    $region11: #{tds_block.3} parent=5 // pred_region
      %s139 = ssub.s32 %s10, 1
      // Predicated region
      $region13: #{tds_block.3} parent=11 // pred_check
        %p140 = pneg %p57
      $region14: #{tds_block.3} parent=11 // pred_check_branch
        %142 = sbr.rel (%p140) target = $region16
      $region15: #{tds_block.3} parent=11 // pred_region
        _
      $region16: #{tds_block.3} parent=11 // pred_fallthru
        _
      // Predicated region
      $region17: #{tds_block.3} parent=11 // pred_check
        %p143 = pneg %p78
      $region18: #{tds_block.3} parent=11 // pred_check_branch
        %145 = sbr.rel (%p143) target = $region20
      $region19: #{tds_block.3} parent=11 // pred_region
        _
      $region20: #{tds_block.3} parent=11 // pred_fallthru
        _
      // Predicated region
      $region21: #{tds_block.3} parent=11 // pred_check
        %p146 = pneg %p99
      $region22: #{tds_block.3} parent=11 // pred_check_branch
        %148 = sbr.rel (%p146) target = $region24
      $region23: #{tds_block.3} parent=11 // pred_region
        _
      $region24: #{tds_block.3} parent=11 // pred_fallthru
        _
    $region12: #{tds_block.3} parent=5 // pred_fallthru
      _
    %p149 = scmp.lt.s32.totalorder %s10, 2
    // Predicated region
    $region25: #{tds_block.3} parent=5 // pred_check
      %p150 = pneg %p149
    $region26: #{tds_block.3} parent=5 // pred_check_branch
      %152 = sbr.rel (%p150) target = $region28
    $region27: #{tds_block.3} parent=5 // pred_region
      // Predicated region
      $region29: #{tds_block.3} parent=27 // pred_check
        %p153 = pneg %p30
      $region30: #{tds_block.3} parent=27 // pred_check_branch
        %155 = sbr.rel (%p153) target = $region32
      $region31: #{tds_block.3} parent=27 // pred_region
        %p156 = scmp.lt.s32.totalorder %s10, 1
        %s157 = scalar_select %p156, %s10, 1
        %s158 = smul.addr %s157, 4
        %s159 = smul.addr %s158, 8
        %s160 = scalar_lea.vmem %s0, %s159
      $region32: #{tds_block.3} parent=27 // pred_fallthru
        _
    $region28: #{tds_block.3} parent=5 // pred_fallthru
      _
    %p161 = scmp.le.s32.totalorder 1, %s10
    %p162 = scmp.lt.s32.totalorder %s10, 3
    %p163 = pnand %p161, %p162
    %p164 = pneg %p163
    // Predicated region
    $region33: #{tds_block.3} parent=5 // pred_check
      _
    $region34: #{tds_block.3} parent=5 // pred_check_branch
      %166 = sbr.rel (%p163) target = $region36
    $region35: #{tds_block.3} parent=5 // pred_region
      %s167 = ssub.s32 %s10, 1
      %p168 = scmp.lt.s32.totalorder %s15, 1
      %s169 = scalar_select %p168, %s15, 1
      %s170 = smul.addr %s169, 4
      %s171 = smul.addr %s170, 8
      %s172 = scalar_lea.vmem %s0, %s171
      %p173 = pneg %p36
      %p174 = pneg %p33
      %p175 = pneg %p57
      %p176 = pneg %p54
      %p177 = pneg %p78
      %p178 = pneg %p75
      %p179 = pneg %p99
      %p180 = pneg %p96
      %p181 = pneg %p125
      %p182 = pneg %p122
      %p183 = scmp.lt.s32.totalorder %s15, 1
      %s184 = scalar_select %p183, %s15, 1
      %s185 = smul.addr %s184, 4
      %s186 = smul.addr %s185, 8
      %s187 = scalar_lea.vmem %s4, %s186
      %p188 = scmp.lt.s32.totalorder %s15, 1
      %s189 = scalar_select %p188, %s15, 1
      %s190 = smul.addr %s189, 4
      %s191 = smul.addr %s190, 8
      %s192 = scalar_lea.vmem %s0, %s191
      %p193 = scmp.lt.s32.totalorder %s15, 1
      %s194 = scalar_select %p193, %s15, 1
      %s195 = smul.addr %s194, 4
      %s196 = smul.addr %s195, 8
      %s197 = scalar_lea.vmem %s4, %s196
      %v199 = vld [vmem:[%s192] sm:$0xff]
      %v200 = vld [vmem:[%s192 + $0x8] sm:$0xff]
      %v201 = vld [vmem:[%s192 + $0x10] sm:$0xff]
      %v202 = vld [vmem:[%s192 + $0x18] sm:$0xff]
      %v203 = vld [vmem:[%s3] sm:$0xff]
      %v204 = vld [vmem:[%s3 + $0x8] sm:$0xff]
      %v205 = vld [vmem:[%s3 + $0x10] sm:$0xff]
      %v206 = vld [vmem:[%s3 + $0x18] sm:$0xff]
      %vm207 = vcmask 130048
      %v208 = vsel %vm207, %v199, 0.0
      %209 = vadd.xlane.f32.xlu0 %v208
      %v210 = vpop.xlane.xlu0 %209
      %v211 = vsel %vm207, %v200, 0.0
      %212 = vadd.xlane.f32.xlu0 %v211
      %v213 = vpop.xlane.xlu0 %212
      %v214 = vsel %vm207, %v201, 0.0
      %215 = vadd.xlane.f32.xlu0 %v214
      %v216 = vpop.xlane.xlu0 %215
      %v217 = vsel %vm207, %v202, 0.0
      %218 = vadd.xlane.f32.xlu0 %v217
      %v219 = vpop.xlane.xlu0 %218
      %v220 = vrcp.pop 16.0
      %v221 = vmul.f32 %v210, %v220
      %v222 = vmul.f32 %v213, %v220
      %v223 = vmul.f32 %v216, %v220
      %v224 = vmul.f32 %v219, %v220
      %v225 = vsub.f32 %v199, %v221
      %v226 = vsub.f32 %v200, %v222
      %v227 = vsub.f32 %v201, %v223
      %v228 = vsub.f32 %v202, %v224
      %v229 = vmul.f32 %v225, %v225
      %v230 = vmul.f32 %v226, %v226
      %v231 = vmul.f32 %v227, %v227
      %v232 = vmul.f32 %v228, %v228
      %v233 = vsel %vm207, %v229, 0.0
      %234 = vadd.xlane.f32.xlu0 %v233
      %v235 = vpop.xlane.xlu0 %234
      %v236 = vsel %vm207, %v230, 0.0
      %237 = vadd.xlane.f32.xlu0 %v236
      %v238 = vpop.xlane.xlu0 %237
      %v239 = vsel %vm207, %v231, 0.0
      %240 = vadd.xlane.f32.xlu0 %v239
      %v241 = vpop.xlane.xlu0 %240
      %v242 = vsel %vm207, %v232, 0.0
      %243 = vadd.xlane.f32.xlu0 %v242
      %v244 = vpop.xlane.xlu0 %243
      %v245 = vmul.f32 %v235, %v220
      %v246 = vmul.f32 %v238, %v220
      %v247 = vmul.f32 %v241, %v220
      %v248 = vmul.f32 %v244, %v220
      %v249 = vadd.f32 %v245, 1e-05
      %v250 = vadd.f32 %v246, 1e-05
      %v251 = vadd.f32 %v247, 1e-05
      %v252 = vadd.f32 %v248, 1e-05
      %v253 = vrsqrt.pop %v249
      %v254 = vrsqrt.pop %v250
      %v255 = vrsqrt.pop %v251
      %v256 = vrsqrt.pop %v252
      %v257 = vmul.f32 %v203, %v253
      %v258 = vmul.f32 %v204, %v254
      %v259 = vmul.f32 %v205, %v255
      %v260 = vmul.f32 %v206, %v256
      %262 = vset.pattern.permute.xlu0 0
      %263 = vperm.xlu0 %262, %v257
      %v264 = vpop.permute.xlu0 %263
      %267 = vset.pattern.permute.xlu0 0
      %268 = vperm.xlu0 %267, %v258
      %v269 = vpop.permute.xlu0 %268
      %272 = vset.pattern.permute.xlu0 0
      %273 = vperm.xlu0 %272, %v259
      %v274 = vpop.permute.xlu0 %273
      %277 = vset.pattern.permute.xlu0 0
      %278 = vperm.xlu0 %277, %v260
      %v279 = vpop.permute.xlu0 %278
      %v281 = vmul.f32 %v225, %v264
      %v282 = vmul.f32 %v226, %v269
      %v283 = vmul.f32 %v227, %v274
      %v284 = vmul.f32 %v228, %v279
      %286 = vset.pattern.permute.xlu0 1
      %287 = vperm.xlu0 %286, %v203
      %v288 = vpop.permute.xlu0 %287
      %291 = vset.pattern.permute.xlu0 1
      %292 = vperm.xlu0 %291, %v204
      %v293 = vpop.permute.xlu0 %292
      %296 = vset.pattern.permute.xlu0 1
      %297 = vperm.xlu0 %296, %v205
      %v298 = vpop.permute.xlu0 %297
      %301 = vset.pattern.permute.xlu0 1
      %302 = vperm.xlu0 %301, %v206
      %v303 = vpop.permute.xlu0 %302
      %v305 = vadd.f32 %v281, %v288
      %v306 = vadd.f32 %v282, %v293
      %v307 = vadd.f32 %v283, %v298
      %v308 = vadd.f32 %v284, %v303
      %v309 = vld [vmem:[%s1] sm:$0xf]
      %v310 = vld [vmem:[%s1 + $0x4] sm:$0xf]
      %v311 = vld [vmem:[%s1 + $0x8] sm:$0xf]
      %v312 = vld [vmem:[%s1 + $0xc] sm:$0xf]
      %v313 = vpack.c.bf16 %v306, %v305
      %v314 = vpack.c.bf16 %v308, %v307
      %315 = vset.pattern.permute.xlu0 2
      %316 = vperm.xlu0 %315, %v203
      %v317 = vpop.permute.xlu0 %316
      %319 = vset.pattern.permute.xlu0 2
      %320 = vperm.xlu0 %319, %v204
      %v321 = vpop.permute.xlu0 %320
      %323 = vset.pattern.permute.xlu0 2
      %324 = vperm.xlu0 %323, %v205
      %v325 = vpop.permute.xlu0 %324
      %327 = vset.pattern.permute.xlu0 2
      %328 = vperm.xlu0 %327, %v206
      %v329 = vpop.permute.xlu0 %328
      %v335 = vunpack.c.l.b16 %v309
      %v336 = vunpack.c.l.b16 %v310
      %v337 = vunpack.c.l.b16 %v311
      %v338 = vunpack.c.l.b16 %v312
      %v339 = vpack.c.b16 %v336, %v335
      %v340 = vpack.c.b16 %v338, %v337
      %vm341 = vcmask 261120
      %v343 = vsel %vm341, %v339, 0
      %v346 = vsel %vm341, %v340, 0
      %348 = vmatprep.subr.bf16.mxu0 0
      %349 = vmatpush1.bf16.msra.mxu0 %v313
      %350 = vmatprep.subr.bf16.mxu0 0
      %351 = vmatpush1.bf16.msra.mxu0 %v314
      %352 = vmatprep.subr.bf16.mxu0 0
      %353 = vmatpush1.bf16.msra.mxu0 0
      %354 = vmatprep.subr.bf16.mxu0 0
      %355 = vmatpush1.bf16.msra.mxu0 0
      %356 = vmatprep.subr.bf16.mxu0 0
      %357 = vmatpush1.bf16.msra.mxu0 0
      %358 = vmatprep.subr.bf16.mxu0 0
      %359 = vmatpush1.bf16.msra.mxu0 0
      %360 = vmatprep.subr.bf16.mxu0 0
      %361 = vmatpush1.bf16.msra.mxu0 0
      %362 = vmatprep.subr.bf16.mxu0 0
      %363 = vmatpush1.bf16.msra.mxu0 0
      %364 = vmatprep.subr.bf16.mxu0 0
      %365 = vmatpush1.bf16.msra.mxu0 0
      %366 = vmatprep.subr.bf16.mxu0 0
      %367 = vmatpush1.bf16.msra.mxu0 0
      %368 = vmatprep.subr.bf16.mxu0 0
      %369 = vmatpush1.bf16.msra.mxu0 0
      %370 = vmatprep.subr.bf16.mxu0 0
      %371 = vmatpush1.bf16.msra.mxu0 0
      %372 = vmatprep.subr.bf16.mxu0 0
      %373 = vmatpush1.bf16.msra.mxu0 0
      %374 = vmatprep.subr.bf16.mxu0 0
      %375 = vmatpush1.bf16.msra.mxu0 0
      %376 = vmatprep.subr.bf16.mxu0 0
      %377 = vmatpush1.bf16.msra.mxu0 0
      %378 = vmatprep.subr.bf16.mxu0 0
      %379 = vmatpush1.bf16.msra.mxu0 0
      %380 = vmatprep.mubr.bf16.mxu0 0
      %381 = vmatmul.mubr.bf16.gmra.mrb[0].mxu0 %v343
      %v382 = vpop.f32.mrb[0].mxu0
      %v383 = vadd.f32 %v317, %v382
      %v384 = vpop.f32.mrb[0].mxu0
      %v385 = vpop.f32.mrb[0].mxu0
      %v386 = vadd.f32 %v321, %v385
      %v387 = vpop.f32.mrb[0].mxu0
      %388 = vmatprep.mubr.bf16.mxu0 0
      %389 = vmatmul.mubr.bf16.gmra.mrb[0].mxu0 %v346
      %v390 = vpop.f32.mrb[0].mxu0
      %v391 = vadd.f32 %v325, %v390
      %v392 = vpop.f32.mrb[0].mxu0
      %v393 = vpop.f32.mrb[0].mxu0
      %v394 = vadd.f32 %v329, %v393
      %v395 = vpop.f32.mrb[0].mxu0
      %396 = vdwg.mxu0
      %v397 = vmax.f32 %v383, 0.0
      %v398 = vmax.f32 %v386, 0.0
      %v399 = vmax.f32 %v391, 0.0
      %v400 = vmax.f32 %v394, 0.0
      %v401 = vld [vmem:[%s2] sm:$0xf]
      %v402 = vld [vmem:[%s2 + $0x4] sm:$0xf]
      %v403 = vld [vmem:[%s2 + $0x8] sm:$0xf]
      %v404 = vld [vmem:[%s2 + $0xc] sm:$0xf]
      %v405 = vpack.c.bf16 %v398, %v397
      %v406 = vpack.c.bf16 %v400, %v399
      %407 = vset.pattern.permute.xlu0 3
      %408 = vperm.xlu0 %407, %v203
      %v409 = vpop.permute.xlu0 %408
      %411 = vset.pattern.permute.xlu0 3
      %412 = vperm.xlu0 %411, %v204
      %v413 = vpop.permute.xlu0 %412
      %415 = vset.pattern.permute.xlu0 3
      %416 = vperm.xlu0 %415, %v205
      %v417 = vpop.permute.xlu0 %416
      %419 = vset.pattern.permute.xlu0 3
      %420 = vperm.xlu0 %419, %v206
      %v421 = vpop.permute.xlu0 %420
      %v427 = vunpack.c.l.b16 %v401
      %v428 = vunpack.c.l.b16 %v402
      %v429 = vunpack.c.l.b16 %v403
      %v430 = vunpack.c.l.b16 %v404
      %v431 = vpack.c.b16 %v428, %v427
      %v432 = vpack.c.b16 %v430, %v429
      %v434 = vsel %vm341, %v431, 0
      %v437 = vsel %vm341, %v432, 0
      %439 = vmatprep.subr.bf16.mxu0 0
      %440 = vmatpush1.bf16.msra.mxu0 %v405
      %441 = vmatprep.subr.bf16.mxu0 0
      %442 = vmatpush1.bf16.msra.mxu0 %v406
      %443 = vmatprep.subr.bf16.mxu0 0
      %444 = vmatpush1.bf16.msra.mxu0 0
      %445 = vmatprep.subr.bf16.mxu0 0
      %446 = vmatpush1.bf16.msra.mxu0 0
      %447 = vmatprep.subr.bf16.mxu0 0
      %448 = vmatpush1.bf16.msra.mxu0 0
      %449 = vmatprep.subr.bf16.mxu0 0
      %450 = vmatpush1.bf16.msra.mxu0 0
      %451 = vmatprep.subr.bf16.mxu0 0
      %452 = vmatpush1.bf16.msra.mxu0 0
      %453 = vmatprep.subr.bf16.mxu0 0
      %454 = vmatpush1.bf16.msra.mxu0 0
      %455 = vmatprep.subr.bf16.mxu0 0
      %456 = vmatpush1.bf16.msra.mxu0 0
      %457 = vmatprep.subr.bf16.mxu0 0
      %458 = vmatpush1.bf16.msra.mxu0 0
      %459 = vmatprep.subr.bf16.mxu0 0
      %460 = vmatpush1.bf16.msra.mxu0 0
      %461 = vmatprep.subr.bf16.mxu0 0
      %462 = vmatpush1.bf16.msra.mxu0 0
      %463 = vmatprep.subr.bf16.mxu0 0
      %464 = vmatpush1.bf16.msra.mxu0 0
      %465 = vmatprep.subr.bf16.mxu0 0
      %466 = vmatpush1.bf16.msra.mxu0 0
      %467 = vmatprep.subr.bf16.mxu0 0
      %468 = vmatpush1.bf16.msra.mxu0 0
      %469 = vmatprep.subr.bf16.mxu0 0
      %470 = vmatpush1.bf16.msra.mxu0 0
      %471 = vmatprep.mubr.bf16.mxu0 0
      %472 = vmatmul.mubr.bf16.gmra.mrb[0].mxu0 %v434
      %v473 = vpop.f32.mrb[0].mxu0
      %v474 = vadd.f32 %v409, %v473
      %v475 = vpop.f32.mrb[0].mxu0
      %v476 = vpop.f32.mrb[0].mxu0
      %v477 = vadd.f32 %v413, %v476
      %v478 = vpop.f32.mrb[0].mxu0
      %479 = vmatprep.mubr.bf16.mxu0 0
      %480 = vmatmul.mubr.bf16.gmra.mrb[0].mxu0 %v437
      %v481 = vpop.f32.mrb[0].mxu0
      %v482 = vadd.f32 %v417, %v481
      %v483 = vpop.f32.mrb[0].mxu0
      %v484 = vpop.f32.mrb[0].mxu0
      %v485 = vadd.f32 %v421, %v484
      %v486 = vpop.f32.mrb[0].mxu0
      %487 = vdwg.mxu0
      %v488 = vadd.f32 %v474, %v305
      %v489 = vadd.f32 %v477, %v306
      %v490 = vadd.f32 %v482, %v307
      %v491 = vadd.f32 %v485, %v308
      %v492 = vsel %vm207, %v488, 0.0
      %493 = vadd.xlane.f32.xlu0 %v492
      %v494 = vpop.xlane.xlu0 %493
      %v495 = vsel %vm207, %v489, 0.0
      %496 = vadd.xlane.f32.xlu0 %v495
      %v497 = vpop.xlane.xlu0 %496
      %v498 = vsel %vm207, %v490, 0.0
      %499 = vadd.xlane.f32.xlu0 %v498
      %v500 = vpop.xlane.xlu0 %499
      %v501 = vsel %vm207, %v491, 0.0
      %502 = vadd.xlane.f32.xlu0 %v501
      %v503 = vpop.xlane.xlu0 %502
      %v504 = vmul.f32 %v494, %v220
      %v505 = vmul.f32 %v497, %v220
      %v506 = vmul.f32 %v500, %v220
      %v507 = vmul.f32 %v503, %v220
      %v508 = vsub.f32 %v488, %v504
      %v509 = vsub.f32 %v489, %v505
      %v510 = vsub.f32 %v490, %v506
      %v511 = vsub.f32 %v491, %v507
      %v512 = vmul.f32 %v508, %v508
      %v513 = vmul.f32 %v509, %v509
      %v514 = vmul.f32 %v510, %v510
      %v515 = vmul.f32 %v511, %v511
      %v516 = vsel %vm207, %v512, 0.0
      %517 = vadd.xlane.f32.xlu0 %v516
      %v518 = vpop.xlane.xlu0 %517
      %v519 = vsel %vm207, %v513, 0.0
      %520 = vadd.xlane.f32.xlu0 %v519
      %v521 = vpop.xlane.xlu0 %520
      %v522 = vsel %vm207, %v514, 0.0
      %523 = vadd.xlane.f32.xlu0 %v522
      %v524 = vpop.xlane.xlu0 %523
      %v525 = vsel %vm207, %v515, 0.0
      %526 = vadd.xlane.f32.xlu0 %v525
      %v527 = vpop.xlane.xlu0 %526
      %v528 = vmul.f32 %v518, %v220
      %v529 = vmul.f32 %v521, %v220
      %v530 = vmul.f32 %v524, %v220
      %v531 = vmul.f32 %v527, %v220
      %v532 = vadd.f32 %v528, 1e-05
      %v533 = vadd.f32 %v529, 1e-05
      %v534 = vadd.f32 %v530, 1e-05
      %v535 = vadd.f32 %v531, 1e-05
      %v536 = vrsqrt.pop %v532
      %v537 = vrsqrt.pop %v533
      %v538 = vrsqrt.pop %v534
      %v539 = vrsqrt.pop %v535
      %v540 = vmul.f32 %v203, %v536
      %v541 = vmul.f32 %v204, %v537
      %v542 = vmul.f32 %v205, %v538
      %v543 = vmul.f32 %v206, %v539
      %545 = vset.pattern.permute.xlu0 4
      %546 = vperm.xlu0 %545, %v540
      %v547 = vpop.permute.xlu0 %546
      %550 = vset.pattern.permute.xlu0 4
      %551 = vperm.xlu0 %550, %v541
      %v552 = vpop.permute.xlu0 %551
      %555 = vset.pattern.permute.xlu0 4
      %556 = vperm.xlu0 %555, %v542
      %v557 = vpop.permute.xlu0 %556
      %560 = vset.pattern.permute.xlu0 4
      %561 = vperm.xlu0 %560, %v543
      %v562 = vpop.permute.xlu0 %561
      %v564 = vmul.f32 %v508, %v547
      %v565 = vmul.f32 %v509, %v552
      %v566 = vmul.f32 %v510, %v557
      %v567 = vmul.f32 %v511, %v562
      %568 = vset.pattern.permute.xlu0 5
      %569 = vperm.xlu0 %568, %v203
      %v570 = vpop.permute.xlu0 %569
      %572 = vset.pattern.permute.xlu0 5
      %573 = vperm.xlu0 %572, %v204
      %v574 = vpop.permute.xlu0 %573
      %576 = vset.pattern.permute.xlu0 5
      %577 = vperm.xlu0 %576, %v205
      %v578 = vpop.permute.xlu0 %577
      %580 = vset.pattern.permute.xlu0 5
      %581 = vperm.xlu0 %580, %v206
      %v582 = vpop.permute.xlu0 %581
      %v584 = vadd.f32 %v564, %v570
      %v585 = vadd.f32 %v565, %v574
      %v586 = vadd.f32 %v566, %v578
      %v587 = vadd.f32 %v567, %v582
      %588 = vst.msk [vmem:[%s197] sm:$0xff] %vm207, %v584
      %589 = vst.msk [vmem:[%s197 + $0x8] sm:$0xff] %vm207, %v585
      %590 = vst.msk [vmem:[%s197 + $0x10] sm:$0xff] %vm207, %v586
      %591 = vst.msk [vmem:[%s197 + $0x18] sm:$0xff] %vm207, %v587
      %p592 = scmp.lt.s32.totalorder %s15, 1
      %s593 = scalar_select %p592, %s15, 1
      %s594 = smul.addr %s593, 4
      %s595 = smul.addr %s594, 8
      %s596 = scalar_lea.vmem %s4, %s595
      // Predicated region
      $region37: #{tds_block.3} parent=35 // pred_check
        %p597 = pneg %p122
      $region38: #{tds_block.3} parent=35 // pred_check_branch
        %599 = sbr.rel (%p597) target = $region40
      $region39: #{tds_block.3} parent=35 // pred_region
        _
      $region40: #{tds_block.3} parent=35 // pred_fallthru
        _
    $region36: #{tds_block.3} parent=5 // pred_fallthru
      _
    %p600 = scmp.le.s32.totalorder 2, %s10
    // Predicated region
    $region41: #{tds_block.3} parent=5 // pred_check
      %p601 = pneg %p600
    $region42: #{tds_block.3} parent=5 // pred_check_branch
      %603 = sbr.rel (%p601) target = $region44
    $region43: #{tds_block.3} parent=5 // pred_region
      %s604 = ssub.s32 %s10, 2
      // Predicated region
      $region45: #{tds_block.3} parent=43 // pred_check
        %p605 = pneg %p128
      $region46: #{tds_block.3} parent=43 // pred_check_branch
        %607 = sbr.rel (%p605) target = $region48
      $region47: #{tds_block.3} parent=43 // pred_region
        %p608 = scmp.lt.s32.totalorder %s16, 1
        %s609 = scalar_select %p608, %s16, 1
        %s610 = smul.addr %s609, 4
        %s611 = smul.addr %s610, 8
        %s612 = scalar_lea.vmem %s4, %s611
      $region48: #{tds_block.3} parent=43 // pred_fallthru
        _
    $region44: #{tds_block.3} parent=5 // pred_fallthru
      _
  $region6: #{tds_block.3} parent=0 // loop_footer
    %s14 = sadd.s32 1, %s10
  $region7: #{tds_block.3} parent=0 // loop_footer_branch
    %9 = sbr.rel target = $region3
  $region8: #{tds_block.3} parent=0 // loop_exit
    _

</llo_original>
